<compile_context>
chip_gen: v7x
topology: tpu7x:2x2x1
jax: 0.10.0
libtpu: 0.0.40
codegen_flags: <defaults>
</compile_context>

<pallas_src>
import functools

import jax
import jax.numpy as jnp
from jax.experimental import pallas as pl
from jax.experimental.pallas import tpu as pltpu

LANE = 128      # TPU vreg lane width (last dim)
SUBLANE = 8     # TPU vreg sublane width (second-to-last dim, f32)


def _round_up(n, m):
    return ((n + m - 1) // m) * m


# ----------------------------------------------------------------------------
# Pallas kernel: fused  y = (relu(x @ W1 + b1)) @ W2 + b2
# All operands are whole arrays resident in VMEM (shapes are tiny).
# ----------------------------------------------------------------------------
def _fused_mlp_kernel(x_ref, w1_ref, b1_ref, w2_ref, b2_ref, o_ref):
    # x:  [Bp, D0p]  bf16      w1: [D0p, D1p] bf16     b1: [1, D1p] f32
    # w2: [D1p, D2p] bf16      b2: [1, D2p]  f32       o:  [Bp, D2p] f32
    h = jnp.dot(x_ref[...], w1_ref[...], preferred_element_type=jnp.float32)
    h = jnp.maximum(h + b1_ref[...], 0.0)        # f32 epilogue (v5e-safe)
    h = h.astype(jnp.bfloat16)                   # MXU-native operand dtype
    y = jnp.dot(h, w2_ref[...], preferred_element_type=jnp.float32)
    o_ref[...] = (y + b2_ref[...]).astype(o_ref.dtype)


def fused_mlp_pallas(x_pad, w1, b1, w2, b2):
    """Single fused two-layer MLP.  No grid: whole (padded) arrays live in
    VMEM; intermediate activation stays on-chip."""
    Bp = x_pad.shape[0]
    D2p = w2.shape[1]
    return pl.pallas_call(
        _fused_mlp_kernel,
        out_shape=jax.ShapeDtypeStruct((Bp, D2p), jnp.float32),
        in_specs=[pl.BlockSpec(memory_space=pltpu.MemorySpace.VMEM)] * 5,
        out_specs=pl.BlockSpec(memory_space=pltpu.MemorySpace.VMEM),
    )(x_pad, w1, b1, w2, b2)
    # TODO(synk): if the config ever scales B / D beyond a few hundred, switch
    # to a tiled grid (tm x tn output tiles, tk reduction, pl.when init/
    # finalize, dimension_semantics=("parallel","parallel","arbitrary")).


# ----------------------------------------------------------------------------
# "Registry" of subnet builders (stand-in for MODULES in the PyTorch code).
# Builders return lane-padded bf16 weights + f32 bias.
# ----------------------------------------------------------------------------
def _make_linear_block(key, d_in, d_out, relu):
    d_in_p = _round_up(d_in, LANE)
    d_out_p = _round_up(d_out, LANE)
    kw, kb = jax.random.split(key)
    w = jax.random.normal(kw, (d_in, d_out), jnp.float32) / jnp.sqrt(d_in)
    b = jax.random.normal(kb, (1, d_out), jnp.float32) * 0.01
    w_pad = jnp.zeros((d_in_p, d_out_p), jnp.bfloat16)
    w_pad = w_pad.at[:d_in, :d_out].set(w.astype(jnp.bfloat16))
    b_pad = jnp.zeros((1, d_out_p), jnp.float32).at[:, :d_out].set(b)
    return {"w": w_pad, "b": b_pad, "relu": relu,
            "d_in": d_in, "d_out": d_out}


MODULES = {
    "mlp_relu": lambda key, spec: _make_linear_block(
        key, spec["d_in"], spec["d_out"], relu=True),
    "mlp": lambda key, spec: _make_linear_block(
        key, spec["d_in"], spec["d_out"], relu=False),
}


def _fused_forward(params, x, *, d_out):
    """pad -> fused Pallas kernel -> slice.  Meant to run under jax.jit."""
    enc, dec = params["encoder"], params["decoder"]
    B, D_in = x.shape
    Bp = _round_up(B, SUBLANE)
    D0p = enc["w"].shape[0]
    x_pad = jnp.zeros((Bp, D0p), jnp.bfloat16)
    x_pad = x_pad.at[:B, :D_in].set(x.astype(jnp.bfloat16))
    y_pad = fused_mlp_pallas(x_pad, enc["w"], enc["b"], dec["w"], dec["b"])
    return y_pad[:B, :d_out]


class BaseNetworkPallas:
    """JAX/Pallas analogue of BaseNetwork: builds submodules from a config
    registry and composes them in forward().  For the synthetic two-phase
    config (encoder: Linear+ReLU, decoder: Linear) the composition is fused
    into a single Pallas kernel and jit-compiled."""

    def __init__(self, cfg, key):
        self.cfg = cfg
        self.params = {}
        self.phase_order = []
        for phase_name, net_spec in cfg["model"].items():
            key, sub = jax.random.split(key)
            self.params[phase_name] = MODULES[net_spec["method"]](sub, net_spec)
            self.phase_order.append(phase_name)
        # TODO(synk): loss-function registry (LOSSES) and module freezing are
        # training-time host logic; no device kernel equivalent.

        # This implementation fuses the exact encoder(relu) -> decoder chain.
        assert self.phase_order == ["encoder", "decoder"]
        assert self.params["encoder"]["relu"] and not self.params["decoder"]["relu"]
        assert self.params["encoder"]["d_out"] == self.params["decoder"]["d_in"]
        # TODO(synk): general N-phase composition would chain fused kernels.

        self._forward = jax.jit(functools.partial(
            _fused_forward, d_out=self.params["decoder"]["d_out"]))

    def forward(self, x):
        return self._forward(self.params, x)


if __name__ == "__main__":
    # Synthetic deterministic config (stands in for cfg.config['model']).
    cfg = {
        "mode": "eval",
        "model": {
            "encoder": {"method": "mlp_relu", "d_in": 32, "d_out": 64,
                        "loss": "Null"},
            "decoder": {"method": "mlp", "d_in": 64, "d_out": 32,
                        "loss": "Null"},
        },
    }

    key = jax.random.PRNGKey(0)
    key, net_key, x_key = jax.random.split(key, 3)

    net = BaseNetworkPallas(cfg, net_key)

    B, D = 8, 32
    x = jax.random.normal(x_key, (B, D), jnp.float32)   # layout: [B, D]

    out = net.forward(x)
    out = jax.block_until_ready(out)
    assert out.shape == (B, 32)

    # Cross-check against plain-JAX reference (same bf16-quantized params).
    w1 = net.params["encoder"]["w"].astype(jnp.float32)
    b1 = net.params["encoder"]["b"]
    w2 = net.params["decoder"]["w"].astype(jnp.float32)
    b2 = net.params["decoder"]["b"]
    Bp = _round_up(B, SUBLANE)
    x_pad = jnp.zeros((Bp, w1.shape[0]), jnp.float32)
    x_pad = x_pad.at[:B, :D].set(x.astype(jnp.bfloat16).astype(jnp.float32))
    h_ref = jnp.maximum(x_pad @ w1 + b1, 0.0)
    h_ref = h_ref.astype(jnp.bfloat16).astype(jnp.float32)
    ref = (h_ref @ w2 + b2)[:B, :32]
    assert jnp.allclose(out, ref, atol=1e-3, rtol=1e-3), (
        float(jnp.max(jnp.abs(out - ref))))

    print("KERNEL_OK")
</pallas_src>

<mosaic_0001>
module attributes {stable_mosaic.version = 11 : i64} {
  func.func @_fused_mlp_kernel(%arg0: memref<8x128xbf16, #tpu.memory_space<vmem>>, %arg1: memref<128x128xbf16, #tpu.memory_space<vmem>>, %arg2: memref<1x128xf32, #tpu.memory_space<vmem>>, %arg3: memref<128x128xbf16, #tpu.memory_space<vmem>>, %arg4: memref<1x128xf32, #tpu.memory_space<vmem>>, %arg5: memref<8x128xf32, #tpu.memory_space<vmem>>) attributes {dimension_semantics = [], scalar_prefetch = 0 : i64, scratch_operands = 0 : i64, tpu.core_type = #tpu.core_type<tc>} {
    %c0 = arith.constant 0 : index
    %c0_0 = arith.constant 0 : index
    %0 = vector.load %arg0[%c0, %c0_0] : memref<8x128xbf16, #tpu.memory_space<vmem>>, vector<8x128xbf16>
    %c0_1 = arith.constant 0 : index
    %c0_2 = arith.constant 0 : index
    %1 = vector.load %arg1[%c0_1, %c0_2] : memref<128x128xbf16, #tpu.memory_space<vmem>>, vector<128x128xbf16>
    %cst = arith.constant dense<0.000000e+00> : vector<8x128xf32>
    %2 = tpu.matmul %0, %1, %cst {dimension_numbers = #tpu.dot_dimension_numbers<[1], [0], [0], [1], [0, 0, 1, 1], [], []>} : vector<8x128xbf16>, vector<128x128xbf16>, vector<8x128xf32> -> vector<8x128xf32>
    %c0_3 = arith.constant 0 : index
    %c0_4 = arith.constant 0 : index
    %3 = vector.load %arg2[%c0_3, %c0_4] : memref<1x128xf32, #tpu.memory_space<vmem>>, vector<1x128xf32>
    %4 = vector.broadcast %3 : vector<1x128xf32> to vector<8x128xf32>
    %5 = arith.addf %2, %4 : vector<8x128xf32>
    %cst_5 = arith.constant 0.000000e+00 : f32
    %6 = vector.broadcast %cst_5 : f32 to vector<8x128xf32>
    %7 = arith.maximumf %5, %6 : vector<8x128xf32>
    %8 = arith.truncf %7 : vector<8x128xf32> to vector<8x128xbf16>
    %c0_6 = arith.constant 0 : index
    %c0_7 = arith.constant 0 : index
    %9 = vector.load %arg3[%c0_6, %c0_7] : memref<128x128xbf16, #tpu.memory_space<vmem>>, vector<128x128xbf16>
    %cst_8 = arith.constant dense<0.000000e+00> : vector<8x128xf32>
    %10 = tpu.matmul %8, %9, %cst_8 {dimension_numbers = #tpu.dot_dimension_numbers<[1], [0], [0], [1], [0, 0, 1, 1], [], []>} : vector<8x128xbf16>, vector<128x128xbf16>, vector<8x128xf32> -> vector<8x128xf32>
    %c0_9 = arith.constant 0 : index
    %c0_10 = arith.constant 0 : index
    %11 = vector.load %arg4[%c0_9, %c0_10] : memref<1x128xf32, #tpu.memory_space<vmem>>, vector<1x128xf32>
    %12 = vector.broadcast %11 : vector<1x128xf32> to vector<8x128xf32>
    %13 = arith.addf %10, %12 : vector<8x128xf32>
    %c0_11 = arith.constant 0 : index
    %c0_12 = arith.constant 0 : index
    %14 = vector.load %arg5[%c0_11, %c0_12] : memref<8x128xf32, #tpu.memory_space<vmem>>, vector<8x128xf32>
    tpu.vector_store %arg5[%c0_11, %c0_12], %13 {strides = array<i32>} : memref<8x128xf32, #tpu.memory_space<vmem>>, vector<8x128xf32>,
    return
  }
}

</mosaic_0001>

<llo_original>
// kernel: _fused_forward.1
$region0: #{_fused_forward.1}
  #allocation0 [shape = 'u32[]', space=smem, size = 0x4, offset = 0x4, fixed_abs, tag = 'smem constant byte address 0x4 - core index']
  #allocation1 [shape = 'u32[144,128]{1,0:T(1,128)}', space=vmem, size = 0x12000, scoped, tag = 'internal scratch']
  %s0 = inlined_call_operand.vmem [shape: bf16[8,128], index: 0, kind: input, shape index: {}]
  %s1 = inlined_call_operand.hbm [shape: bf16[128,128], index: 1, kind: input, shape index: {}]
  %s2 = inlined_call_operand.vmem [shape: f32[1,128], index: 2, kind: input, shape index: {}]
  %s3 = inlined_call_operand.hbm [shape: bf16[128,128], index: 3, kind: input, shape index: {}]
  %s4 = inlined_call_operand.vmem [shape: f32[1,128], index: 4, kind: input, shape index: {}]
  %s5 = inlined_call_operand.hbm [shape: f32[8,128], index: 5, kind: output, shape index: {}]
  %s6 = sld [smem:[#allocation0]]
  $region38: #{_fused_forward.1} parent=0
    _
  %s8 = ssub.s32 1, %s6
  %s9 = scalar_select 0, %s8, %s6
  $region1: #{_fused_forward.1} parent=0
    #allocation2 [shape = 'u8[32768]{0}', space=vmem, size = 0x8000, scoped, tag = 'input window, operand 1, single buffered']
    #allocation3 [shape = 's32[1]{0}', space=sflag, size = 0x4, scoped, tag = 'scoped memory for _fused_forward.1']
    #allocation4 [shape = 's32[1]{0}', space=sflag, size = 0x4, scoped, tag = 'scoped memory for _fused_forward.1']
    #allocation5 [shape = 'u8[32768]{0}', space=vmem, size = 0x8000, scoped, tag = 'input window, operand 3, single buffered']
    #allocation6 [shape = 's32[1]{0}', space=sflag, size = 0x4, scoped, tag = 'scoped memory for _fused_forward.1']
    #allocation7 [shape = 'u8[4096]{0}', space=vmem, size = 0x1000, scoped, tag = 'output window, operand 0, single buffered']
    %10 = vsyncpa [#allocation3], 0
    %11 = vsyncpa [#allocation6], 0
    %12 = vsyncpa [#allocation4], 0
    // Predicated region
    $region2: #{_fused_forward.1} parent=1 // pred_check
      _
    $region3: #{_fused_forward.1} parent=1 // pred_check_branch
      %14 = sbr.rel (0) target = $region5
    $region4: #{_fused_forward.1} parent=1 // pred_region
      _
    $region5: #{_fused_forward.1} parent=1 // pred_fallthru
      _
    // Predicated region
    $region6: #{_fused_forward.1} parent=1 // pred_check
      _
    $region7: #{_fused_forward.1} parent=1 // pred_check_branch
      %16 = sbr.rel (0) target = $region9
    $region8: #{_fused_forward.1} parent=1 // pred_region
      %s18 = ssub.s32 1024, 1024
      %19 = vsyncadd [#allocation3], %s18
      %s20 = sshll.u32 [#allocation2], 4
      %s21 = int_to_ptr.vmem [resolvable:$true] %s20
      %26 = dma.hbm_to_vmem [thread:$0]  %s1, 1024, %s21, [#allocation3], 64, 64, 4
    $region9: #{_fused_forward.1} parent=1 // pred_fallthru
      _
    // Predicated region
    $region10: #{_fused_forward.1} parent=1 // pred_check
      _
    $region11: #{_fused_forward.1} parent=1 // pred_check_branch
      %28 = sbr.rel (0) target = $region13
    $region12: #{_fused_forward.1} parent=1 // pred_region
      _
    $region13: #{_fused_forward.1} parent=1 // pred_fallthru
      _
    // Predicated region
    $region14: #{_fused_forward.1} parent=1 // pred_check
      _
    $region15: #{_fused_forward.1} parent=1 // pred_check_branch
      %30 = sbr.rel (0) target = $region17
    $region16: #{_fused_forward.1} parent=1 // pred_region
      %s32 = ssub.s32 1024, 1024
      %33 = vsyncadd [#allocation6], %s32
      %s34 = sshll.u32 [#allocation5], 4
      %s35 = int_to_ptr.vmem [resolvable:$true] %s34
      %40 = dma.hbm_to_vmem [thread:$0]  %s3, 1024, %s35, [#allocation6], 64, 64, 4
    $region17: #{_fused_forward.1} parent=1 // pred_fallthru
      _
    // Predicated region
    $region18: #{_fused_forward.1} parent=1 // pred_check
      _
    $region19: #{_fused_forward.1} parent=1 // pred_check_branch
      %42 = sbr.rel (0) target = $region21
    $region20: #{_fused_forward.1} parent=1 // pred_region
      _
    $region21: #{_fused_forward.1} parent=1 // pred_fallthru
      _
    // Predicated region
    $region22: #{_fused_forward.1} parent=1 // pred_check
      _
    $region23: #{_fused_forward.1} parent=1 // pred_check_branch
      %44 = sbr.rel (0) target = $region25
    $region24: #{_fused_forward.1} parent=1 // pred_region
      %45 = dma.done [#allocation3], 1024
    $region25: #{_fused_forward.1} parent=1 // pred_fallthru
      _
    // Predicated region
    $region26: #{_fused_forward.1} parent=1 // pred_check
      _
    $region27: #{_fused_forward.1} parent=1 // pred_check_branch
      %47 = sbr.rel (0) target = $region29
    $region28: #{_fused_forward.1} parent=1 // pred_region
      %48 = dma.done [#allocation6], 1024
    $region29: #{_fused_forward.1} parent=1 // pred_fallthru
      _
    %v50 = vld [vmem:[%s0] sm:$0xf]
    %v51 = vld [vmem:[#allocation2] sm:$0xf]
    %v52 = vld [vmem:[#allocation2 + $0x4] sm:$0xf]
    %v53 = vld [vmem:[#allocation2 + $0x8] sm:$0xf]
    %v54 = vld [vmem:[#allocation2 + $0xc] sm:$0xf]
    %v55 = vld [vmem:[#allocation2 + $0x10] sm:$0xf]
    %v56 = vld [vmem:[#allocation2 + $0x14] sm:$0xf]
    %v57 = vld [vmem:[#allocation2 + $0x18] sm:$0xf]
    %v58 = vld [vmem:[#allocation2 + $0x1c] sm:$0xf]
    %v59 = vld [vmem:[#allocation2 + $0x20] sm:$0xf]
    %v60 = vld [vmem:[#allocation2 + $0x24] sm:$0xf]
    %v61 = vld [vmem:[#allocation2 + $0x28] sm:$0xf]
    %v62 = vld [vmem:[#allocation2 + $0x2c] sm:$0xf]
    %v63 = vld [vmem:[#allocation2 + $0x30] sm:$0xf]
    %v64 = vld [vmem:[#allocation2 + $0x34] sm:$0xf]
    %v65 = vld [vmem:[#allocation2 + $0x38] sm:$0xf]
    %v66 = vld [vmem:[#allocation2 + $0x3c] sm:$0xf]
    %v67 = vld [vmem:[%s2] sm:$0x1]
    %v69 = vlaneseq
    %v70 = vshrl.u32 %v69, 7
    %v71 = vsub.s32 0, %v70
    %v72 = vrot.slane %v67, %v71
    %v90 = vunpack.c.l.b16 %v51
    %v91 = vunpack.c.l.b16 %v52
    %v92 = vunpack.c.l.b16 %v53
    %v93 = vunpack.c.l.b16 %v54
    %v94 = vunpack.c.l.b16 %v55
    %v95 = vunpack.c.l.b16 %v56
    %v96 = vunpack.c.l.b16 %v57
    %v97 = vunpack.c.l.b16 %v58
    %v98 = vunpack.c.l.b16 %v59
    %v99 = vunpack.c.l.b16 %v60
    %v100 = vunpack.c.l.b16 %v61
    %v101 = vunpack.c.l.b16 %v62
    %v102 = vunpack.c.l.b16 %v63
    %v103 = vunpack.c.l.b16 %v64
    %v104 = vunpack.c.l.b16 %v65
    %v105 = vunpack.c.l.b16 %v66
    %v106 = vpack.c.b16 %v91, %v90
    %v107 = vpack.c.b16 %v93, %v92
    %v108 = vpack.c.b16 %v95, %v94
    %v109 = vpack.c.b16 %v97, %v96
    %v110 = vpack.c.b16 %v99, %v98
    %v111 = vpack.c.b16 %v101, %v100
    %v112 = vpack.c.b16 %v103, %v102
    %v113 = vpack.c.b16 %v105, %v104
    %122 = vmatprep.subr.bf16.mxu0 0
    %123 = vmatpush1.bf16.msra.mxu0 %v106
    %124 = vmatprep.subr.bf16.mxu0 0
    %125 = vmatpush1.bf16.msra.mxu0 %v107
    %126 = vmatprep.subr.bf16.mxu0 0
    %127 = vmatpush1.bf16.msra.mxu0 %v108
    %128 = vmatprep.subr.bf16.mxu0 0
    %129 = vmatpush1.bf16.msra.mxu0 %v109
    %130 = vmatprep.subr.bf16.mxu0 0
    %131 = vmatpush1.bf16.msra.mxu0 %v110
    %132 = vmatprep.subr.bf16.mxu0 0
    %133 = vmatpush1.bf16.msra.mxu0 %v111
    %134 = vmatprep.subr.bf16.mxu0 0
    %135 = vmatpush1.bf16.msra.mxu0 %v112
    %136 = vmatprep.subr.bf16.mxu0 0
    %137 = vmatpush1.bf16.msra.mxu0 %v113
    %138 = vmatprep.subr.bf16.mxu0 0
    %139 = vmatpush1.bf16.msra.mxu0 0
    %140 = vmatprep.subr.bf16.mxu0 0
    %141 = vmatpush1.bf16.msra.mxu0 0
    %142 = vmatprep.subr.bf16.mxu0 0
    %143 = vmatpush1.bf16.msra.mxu0 0
    %144 = vmatprep.subr.bf16.mxu0 0
    %145 = vmatpush1.bf16.msra.mxu0 0
    %146 = vmatprep.subr.bf16.mxu0 0
    %147 = vmatpush1.bf16.msra.mxu0 0
    %148 = vmatprep.subr.bf16.mxu0 0
    %149 = vmatpush1.bf16.msra.mxu0 0
    %150 = vmatprep.subr.bf16.mxu0 0
    %151 = vmatpush1.bf16.msra.mxu0 0
    %152 = vmatprep.subr.bf16.mxu0 0
    %153 = vmatpush1.bf16.msra.mxu0 0
    %154 = vmatprep.mubr.bf16.mxu0 0
    %155 = vmatmul.mubr.bf16.gmra.mrb[0].mxu0 %v50
    %v156 = vpop.f32.mrb[0].mxu0
    %v157 = vadd.f32 %v72, %v156
    %v158 = vpop.f32.mrb[0].mxu0
    %v159 = vpop.f32.mrb[0].mxu0
    %v160 = vpop.f32.mrb[0].mxu0
    %161 = vdwg.mxu0
    %v162 = vmax.f32 %v157, 0.0
    %v163 = vpack.c.bf16 %v162, %v162
    %v164 = vld [vmem:[#allocation5] sm:$0xf]
    %v165 = vld [vmem:[#allocation5 + $0x4] sm:$0xf]
    %v166 = vld [vmem:[#allocation5 + $0x8] sm:$0xf]
    %v167 = vld [vmem:[#allocation5 + $0xc] sm:$0xf]
    %v168 = vld [vmem:[#allocation5 + $0x10] sm:$0xf]
    %v169 = vld [vmem:[#allocation5 + $0x14] sm:$0xf]
    %v170 = vld [vmem:[#allocation5 + $0x18] sm:$0xf]
    %v171 = vld [vmem:[#allocation5 + $0x1c] sm:$0xf]
    %v172 = vld [vmem:[#allocation5 + $0x20] sm:$0xf]
    %v173 = vld [vmem:[#allocation5 + $0x24] sm:$0xf]
    %v174 = vld [vmem:[#allocation5 + $0x28] sm:$0xf]
    %v175 = vld [vmem:[#allocation5 + $0x2c] sm:$0xf]
    %v176 = vld [vmem:[#allocation5 + $0x30] sm:$0xf]
    %v177 = vld [vmem:[#allocation5 + $0x34] sm:$0xf]
    %v178 = vld [vmem:[#allocation5 + $0x38] sm:$0xf]
    %v179 = vld [vmem:[#allocation5 + $0x3c] sm:$0xf]
    %v180 = vld [vmem:[%s4] sm:$0x1]
    %v182 = vlaneseq
    %v183 = vshrl.u32 %v182, 7
    %v184 = vsub.s32 0, %v183
    %v185 = vrot.slane %v180, %v184
    %v203 = vunpack.c.l.b16 %v164
    %v204 = vunpack.c.l.b16 %v165
    %v205 = vunpack.c.l.b16 %v166
    %v206 = vunpack.c.l.b16 %v167
    %v207 = vunpack.c.l.b16 %v168
    %v208 = vunpack.c.l.b16 %v169
    %v209 = vunpack.c.l.b16 %v170
    %v210 = vunpack.c.l.b16 %v171
    %v211 = vunpack.c.l.b16 %v172
    %v212 = vunpack.c.l.b16 %v173
    %v213 = vunpack.c.l.b16 %v174
    %v214 = vunpack.c.l.b16 %v175
    %v215 = vunpack.c.l.b16 %v176
    %v216 = vunpack.c.l.b16 %v177
    %v217 = vunpack.c.l.b16 %v178
    %v218 = vunpack.c.l.b16 %v179
    %v219 = vpack.c.b16 %v204, %v203
    %v220 = vpack.c.b16 %v206, %v205
    %v221 = vpack.c.b16 %v208, %v207
    %v222 = vpack.c.b16 %v210, %v209
    %v223 = vpack.c.b16 %v212, %v211
    %v224 = vpack.c.b16 %v214, %v213
    %v225 = vpack.c.b16 %v216, %v215
    %v226 = vpack.c.b16 %v218, %v217
    %235 = vmatprep.subr.bf16.mxu0 0
    %236 = vmatpush1.bf16.msra.mxu0 %v219
    %237 = vmatprep.subr.bf16.mxu0 0
    %238 = vmatpush1.bf16.msra.mxu0 %v220
    %239 = vmatprep.subr.bf16.mxu0 0
    %240 = vmatpush1.bf16.msra.mxu0 %v221
    %241 = vmatprep.subr.bf16.mxu0 0
    %242 = vmatpush1.bf16.msra.mxu0 %v222
    %243 = vmatprep.subr.bf16.mxu0 0
    %244 = vmatpush1.bf16.msra.mxu0 %v223
    %245 = vmatprep.subr.bf16.mxu0 0
    %246 = vmatpush1.bf16.msra.mxu0 %v224
    %247 = vmatprep.subr.bf16.mxu0 0
    %248 = vmatpush1.bf16.msra.mxu0 %v225
    %249 = vmatprep.subr.bf16.mxu0 0
    %250 = vmatpush1.bf16.msra.mxu0 %v226
    %251 = vmatprep.subr.bf16.mxu0 0
    %252 = vmatpush1.bf16.msra.mxu0 0
    %253 = vmatprep.subr.bf16.mxu0 0
    %254 = vmatpush1.bf16.msra.mxu0 0
    %255 = vmatprep.subr.bf16.mxu0 0
    %256 = vmatpush1.bf16.msra.mxu0 0
    %257 = vmatprep.subr.bf16.mxu0 0
    %258 = vmatpush1.bf16.msra.mxu0 0
    %259 = vmatprep.subr.bf16.mxu0 0
    %260 = vmatpush1.bf16.msra.mxu0 0
    %261 = vmatprep.subr.bf16.mxu0 0
    %262 = vmatpush1.bf16.msra.mxu0 0
    %263 = vmatprep.subr.bf16.mxu0 0
    %264 = vmatpush1.bf16.msra.mxu0 0
    %265 = vmatprep.subr.bf16.mxu0 0
    %266 = vmatpush1.bf16.msra.mxu0 0
    %267 = vmatprep.mubr.bf16.mxu0 0
    %268 = vmatmul.mubr.bf16.gmra.mrb[0].mxu0 %v163
    %v269 = vpop.f32.mrb[0].mxu0
    %v270 = vadd.f32 %v185, %v269
    %v271 = vpop.f32.mrb[0].mxu0
    %v272 = vpop.f32.mrb[0].mxu0
    %v273 = vpop.f32.mrb[0].mxu0
    %274 = vdwg.mxu0
    %275 = vst [vmem:[#allocation7] sm:$0xff] %v270
    // Predicated region
    $region30: #{_fused_forward.1} parent=1 // pred_check
      _
    $region31: #{_fused_forward.1} parent=1 // pred_check_branch
      %277 = sbr.rel (0) target = $region33
    $region32: #{_fused_forward.1} parent=1 // pred_region
      %s279 = ssub.s32 128, 128
      %280 = vsyncadd [#allocation4], %s279
      %s282 = sshll.u32 [#allocation7], 4
      %s283 = int_to_ptr.vmem [resolvable:$true] %s282
      %285 = dma.vmem_to_hbm [thread:$0]  %s283, 128, %s5, [#allocation4]
    $region33: #{_fused_forward.1} parent=1 // pred_fallthru
      _
    // Predicated region
    $region34: #{_fused_forward.1} parent=1 // pred_check
      _
    $region35: #{_fused_forward.1} parent=1 // pred_check_branch
      %287 = sbr.rel (0) target = $region37
    $region36: #{_fused_forward.1} parent=1 // pred_region
      %288 = dma.done [#allocation4], 128
    $region37: #{_fused_forward.1} parent=1 // pred_fallthru
      _
    %289 = vsyncpa [#allocation3], 1
    %290 = vsyncpa [#allocation6], 1
    %291 = vsyncpa [#allocation4], 1

</llo_original>
